<compile_context>
chip_gen: v6e
topology: v6e:2x2x1
jax: 0.10.0
libtpu: 0.0.40
codegen_flags: <defaults>
</compile_context>

<pallas_src>
import functools
import math

import jax
import jax.numpy as jnp
from jax import lax
from jax.experimental import pallas as pl
from jax.experimental.pallas import tpu as pltpu


# --------------------------- tiling / VMEM budget ---------------------------

def _choose_tq_and_vmem(Sq, Sk, H, num_heads, head_dim,
                        in_itemsize, out_itemsize, score_itemsize,
                        budget_bytes=48 << 20):
    """Pick the largest q-tile whose working set fits a cross-generation VMEM
    budget (v7x: 64 MiB physical; v5e/v6e: 128 MiB physical, smaller scoped
    default) and derive an explicit vmem_limit_bytes."""
    dh_pad = -(-head_dim // 128) * 128          # lane padding of per-head scratch

    def est(tq):
        b = 2 * tq * H * in_itemsize            # hidden_states tile (x2 buffers)
        b += 2 * Sk * H * in_itemsize           # source block (x2 buffers)
        b += 2 * H * H * in_itemsize            # Wq + Wk (Buffered(1))
        b += 2 * H * in_itemsize                # bq + bk (Buffered(1))
        b += 2 * tq * Sk * out_itemsize         # (tq, Sk) output slab (x2 buffers)
        b += num_heads * (tq + Sk) * dh_pad * score_itemsize   # Q / K scratches
        return b

    divisors = [c for c in (1024, 512, 256, 128) if Sq >= c and Sq % c == 0]
    tq = None
    for c in divisors:                          # biggest tile that fits budget
        if est(c) <= budget_bytes:
            tq = c
            break
    if tq is None:
        tq = divisors[-1] if divisors else Sq   # small Sq -> take whole thing
    vmem_limit = int(min(max(est(tq) + (4 << 20), 32 << 20), 56 << 20))
    return tq, vmem_limit


def _const_spec(block_shape, index_map):
    """BlockSpec whose block index never changes -> single-buffered when the
    running JAX supports pipeline_mode (falls back to default otherwise)."""
    try:
        return pl.BlockSpec(block_shape, index_map, pipeline_mode=pl.Buffered(1))
    except (TypeError, AttributeError):
        return pl.BlockSpec(block_shape, index_map)


# --------------------------------- kernel -----------------------------------

def _scores_kernel(x_ref, src_ref, wq_ref, wk_ref, bq_ref, bk_ref, o_ref,
                   q_scr, k_scr, *, num_heads, head_dim, scale):
    qi = pl.program_id(1)
    h = pl.program_id(2)

    # K = src @ Wk + bk, once per batch element (q-tile 0, head 0).  Legal
    # because qi/h are "arbitrary" (serial per core) and scratches persist.
    @pl.when(jnp.logical_and(qi == 0, h == 0))
    def _():
        k = jnp.dot(src_ref[0], wk_ref[...], preferred_element_type=jnp.float32)
        k = k + bk_ref[...].astype(jnp.float32)
        for hh in range(num_heads):            # static head-major scatter
            k_scr[hh] = k[:, hh * head_dim:(hh + 1) * head_dim].astype(k_scr.dtype)

    # Q tile = (x @ Wq + bq) / sqrt(dh), once per (batch, q-tile) (head 0).
    @pl.when(h == 0)
    def _():
        q = jnp.dot(x_ref[0], wq_ref[...], preferred_element_type=jnp.float32)
        q = (q + bq_ref[...].astype(jnp.float32)) * jnp.float32(scale)
        for hh in range(num_heads):
            q_scr[hh] = q[:, hh * head_dim:(hh + 1) * head_dim].astype(q_scr.dtype)

    # One per-head score matmul per grid step: Q_h @ K_h^T (f32 accumulate).
    q_h = q_scr[h]                              # (tq, dh), dynamic leading index
    k_h = k_scr[h]                              # (Sk, dh)
    s = lax.dot_general(q_h, k_h,
                        dimension_numbers=(((1,), (1,)), ((), ())),
                        preferred_element_type=jnp.float32)
    o_ref[0, 0] = s.astype(o_ref.dtype)         # lane-dense (tq, Sk) writeback


# --------------------------------- wrapper ----------------------------------

def source_attends_subthread(hidden_states, source_hidden_states, params, *,
                             num_heads, score_dtype=None):
    """Returns attention_scores of shape (B, num_heads, Sq, Sk)."""
    B, Sq, H = hidden_states.shape
    Bs, Sk, Hs = source_hidden_states.shape
    assert (B, H) == (Bs, Hs)
    assert H % num_heads == 0
    dh = H // num_heads

    in_dtype = hidden_states.dtype
    out_dtype = in_dtype                       # scores follow activation dtype
    if score_dtype is None:
        # bf16 operands for the score matmul when activations are bf16
        # (MXU-native path, f32 accumulation); f32 activations keep f32.
        score_dtype = jnp.bfloat16 if in_dtype == jnp.bfloat16 else jnp.float32

    # Cast projection params to the activation dtype (no mixed-dtype MXU ops).
    wq = params["query"][0].astype(in_dtype)
    bq = params["query"][1].astype(in_dtype).reshape(1, H)
    wk = params["key"][0].astype(in_dtype)
    bk = params["key"][1].astype(in_dtype).reshape(1, H)

    tq, vmem_limit = _choose_tq_and_vmem(
        Sq, Sk, H, num_heads, dh,
        jnp.dtype(in_dtype).itemsize,
        jnp.dtype(out_dtype).itemsize,
        jnp.dtype(score_dtype).itemsize)

    grid = (B, Sq // tq, num_heads)
    kernel = functools.partial(_scores_kernel, num_heads=num_heads,
                               head_dim=dh, scale=1.0 / math.sqrt(dh))

    flops = 2 * B * (Sq + Sk) * H * H + 2 * B * Sq * Sk * H
    bytes_accessed = ((B * Sq * H + B * Sk * H + 2 * H * H + 2 * H)
                      * jnp.dtype(in_dtype).itemsize
                      + B * num_heads * Sq * Sk * jnp.dtype(out_dtype).itemsize)

    return pl.pallas_call(
        kernel,
        out_shape=jax.ShapeDtypeStruct((B, num_heads, Sq, Sk), out_dtype),
        grid=grid,
        in_specs=[
            pl.BlockSpec((1, tq, H), lambda b, qi, h: (b, qi, 0)),   # hidden
            pl.BlockSpec((1, Sk, H), lambda b, qi, h: (b, 0, 0)),    # source
            _const_spec((H, H), lambda b, qi, h: (0, 0)),            # Wq
            _const_spec((H, H), lambda b, qi, h: (0, 0)),            # Wk
            _const_spec((1, H), lambda b, qi, h: (0, 0)),            # bq
            _const_spec((1, H), lambda b, qi, h: (0, 0)),            # bk
        ],
        out_specs=pl.BlockSpec((1, 1, tq, Sk), lambda b, qi, h: (b, h, qi, 0)),
        scratch_shapes=[pltpu.VMEM((num_heads, tq, dh), score_dtype),   # Q
                        pltpu.VMEM((num_heads, Sk, dh), score_dtype)],  # K
        compiler_params=pltpu.CompilerParams(
            dimension_semantics=("parallel", "arbitrary", "arbitrary"),
            vmem_limit_bytes=vmem_limit),
        cost_estimate=pl.CostEstimate(flops=flops, transcendentals=0,
                                      bytes_accessed=bytes_accessed),
    )(hidden_states, source_hidden_states, wq, wk, bq, bk)


# ------------------------------- parameters ---------------------------------

def init_params(key, hidden):
    k1, k2, k3, k4 = jax.random.split(key, 4)
    return {
        # weights stored as (in, out); equivalent to torch nn.Linear weight^T
        "query": (0.02 * jax.random.normal(k1, (hidden, hidden), jnp.float32),
                  0.02 * jax.random.normal(k2, (hidden,), jnp.float32)),
        "key":   (0.02 * jax.random.normal(k3, (hidden, hidden), jnp.float32),
                  0.02 * jax.random.normal(k4, (hidden,), jnp.float32)),
    }


# ----------------------------------- main ------------------------------------

if __name__ == "__main__":
    B, Sq, Sk, H = 2, 16, 8, 32
    num_heads = 4
    dh = H // num_heads

    key = jax.random.PRNGKey(0)
    kx, ks, kp = jax.random.split(key, 3)
    hidden_states = jax.random.normal(kx, (B, Sq, H), jnp.float32)
    source_hidden_states = jax.random.normal(ks, (B, Sk, H), jnp.float32)
    params = init_params(kp, H)

    def reference(x, src, prm):
        dt = x.dtype
        q = x @ prm["query"][0].astype(dt) + prm["query"][1].astype(dt)
        k = src @ prm["key"][0].astype(dt) + prm["key"][1].astype(dt)
        qh = q.reshape(B, Sq, num_heads, dh).transpose(0, 2, 1, 3)
        kh = k.reshape(B, Sk, num_heads, dh).transpose(0, 2, 1, 3)
        return jnp.einsum("bhqd,bhkd->bhqk", qh, kh) / math.sqrt(dh)

    # ---- f32 path (matches the PyTorch reference within float assoc noise) --
    scores = source_attends_subthread(hidden_states, source_hidden_states,
                                      params, num_heads=num_heads)
    scores = jax.block_until_ready(scores)
    assert scores.shape == (B, num_heads, Sq, Sk)
    ref = reference(hidden_states, source_hidden_states, params)
    assert jnp.allclose(scores, ref, atol=1e-4, rtol=1e-4), (
        float(jnp.max(jnp.abs(scores - ref))))

    # ---- bf16 path (exercises the bf16 score-matmul fast path) --------------
    x_bf = hidden_states.astype(jnp.bfloat16)
    s_bf = source_hidden_states.astype(jnp.bfloat16)
    scores_bf = jax.block_until_ready(
        source_attends_subthread(x_bf, s_bf, params, num_heads=num_heads))
    ref_bf = reference(x_bf, s_bf, params)
    assert scores_bf.shape == (B, num_heads, Sq, Sk)
    assert jnp.allclose(scores_bf.astype(jnp.float32),
                        ref_bf.astype(jnp.float32), atol=3e-3, rtol=5e-2), (
        float(jnp.max(jnp.abs(scores_bf.astype(jnp.float32)
                              - ref_bf.astype(jnp.float32)))))

    print("KERNEL_OK")
</pallas_src>

<mosaic_0001>
module attributes {stable_mosaic.version = 11 : i64} {
  func.func @_scores_kernel(%arg0: i32, %arg1: i32, %arg2: i32, %arg3: memref<1x16x32xf32, #tpu.memory_space<vmem>>, %arg4: memref<1x8x32xf32, #tpu.memory_space<vmem>>, %arg5: memref<32x32xf32, #tpu.memory_space<vmem>>, %arg6: memref<32x32xf32, #tpu.memory_space<vmem>>, %arg7: memref<1x32xf32, #tpu.memory_space<vmem>>, %arg8: memref<1x32xf32, #tpu.memory_space<vmem>>, %arg9: memref<1x1x16x8xf32, #tpu.memory_space<vmem>>, %arg10: memref<4x16x8xf32, #tpu.memory_space<vmem>>, %arg11: memref<4x8x8xf32, #tpu.memory_space<vmem>>) attributes {dimension_semantics = [#tpu.dimension_semantics<parallel>, #tpu.dimension_semantics<arbitrary>, #tpu.dimension_semantics<arbitrary>], iteration_bounds = array<i64: 2, 1, 4>, scalar_prefetch = 0 : i64, scratch_operands = 2 : i64, tpu.core_type = #tpu.core_type<tc>, window_params = [{transform_indices = @transform_0, window_bounds = array<i64: 1, 16, 32>}, {transform_indices = @transform_1, window_bounds = array<i64: 1, 8, 32>}, {pipeline_mode = #tpu.pipeline_mode<synchronous>, transform_indices = @transform_2, window_bounds = array<i64: 32, 32>}, {pipeline_mode = #tpu.pipeline_mode<synchronous>, transform_indices = @transform_3, window_bounds = array<i64: 32, 32>}, {pipeline_mode = #tpu.pipeline_mode<synchronous>, transform_indices = @transform_4, window_bounds = array<i64: 1, 32>}, {pipeline_mode = #tpu.pipeline_mode<synchronous>, transform_indices = @transform_5, window_bounds = array<i64: 1, 32>}, {transform_indices = @transform_6, window_bounds = array<i64: 1, 1, 16, 8>}]} {
    %c0_i32 = arith.constant 0 : i32
    %0 = arith.cmpi eq, %arg1, %c0_i32 : i32
    %c0_i32_0 = arith.constant 0 : i32
    %1 = arith.cmpi eq, %arg2, %c0_i32_0 : i32
    %2 = arith.andi %0, %1 : i1
    %3 = arith.extui %2 : i1 to i32
    %c0_i32_1 = arith.constant 0 : i32
    %4 = arith.cmpi ne, %3, %c0_i32_1 : i32
    scf.if %4 {
      %c0_11 = arith.constant 0 : index
      %c0_12 = arith.constant 0 : index
      %c0_13 = arith.constant 0 : index
      %18 = vector.load %arg4[%c0_11, %c0_12, %c0_13] : memref<1x8x32xf32, #tpu.memory_space<vmem>>, vector<1x8x32xf32>
      %19 = vector.shape_cast %18 : vector<1x8x32xf32> to vector<8x32xf32>
      %c0_14 = arith.constant 0 : index
      %c0_15 = arith.constant 0 : index
      %20 = vector.load %arg6[%c0_14, %c0_15] : memref<32x32xf32, #tpu.memory_space<vmem>>, vector<32x32xf32>
      %cst_16 = arith.constant dense<0.000000e+00> : vector<8x32xf32>
      %21 = tpu.matmul %19, %20, %cst_16 {dimension_numbers = #tpu.dot_dimension_numbers<[1], [0], [0], [1], [0, 0, 1, 1], [], []>} : vector<8x32xf32>, vector<32x32xf32>, vector<8x32xf32> -> vector<8x32xf32>
      %c0_17 = arith.constant 0 : index
      %c0_18 = arith.constant 0 : index
      %22 = vector.load %arg8[%c0_17, %c0_18] : memref<1x32xf32, #tpu.memory_space<vmem>>, vector<1x32xf32>
      %23 = vector.broadcast %22 : vector<1x32xf32> to vector<8x32xf32>
      %24 = arith.addf %21, %23 : vector<8x32xf32>
      %25 = vector.extract_strided_slice %24 {offsets = [0, 0], sizes = [8, 8], strides = [1, 1]} : vector<8x32xf32> to vector<8x8xf32>
      %c0_19 = arith.constant 0 : index
      %c0_20 = arith.constant 0 : index
      %c0_21 = arith.constant 0 : index
      %26 = vector.load %arg11[%c0_19, %c0_20, %c0_21] : memref<4x8x8xf32, #tpu.memory_space<vmem>>, vector<1x8x8xf32>
      %27 = vector.shape_cast %26 : vector<1x8x8xf32> to vector<8x8xf32>
      %28 = vector.shape_cast %25 : vector<8x8xf32> to vector<1x8x8xf32>
      tpu.vector_store %arg11[%c0_19, %c0_20, %c0_21], %28 {strides = array<i32>} : memref<4x8x8xf32, #tpu.memory_space<vmem>>, vector<1x8x8xf32>,
      %29 = vector.extract_strided_slice %24 {offsets = [0, 8], sizes = [8, 8], strides = [1, 1]} : vector<8x32xf32> to vector<8x8xf32>
      %c1 = arith.constant 1 : index
      %c0_22 = arith.constant 0 : index
      %c0_23 = arith.constant 0 : index
      %30 = vector.load %arg11[%c1, %c0_22, %c0_23] : memref<4x8x8xf32, #tpu.memory_space<vmem>>, vector<1x8x8xf32>
      %31 = vector.shape_cast %30 : vector<1x8x8xf32> to vector<8x8xf32>
      %32 = vector.shape_cast %29 : vector<8x8xf32> to vector<1x8x8xf32>
      tpu.vector_store %arg11[%c1, %c0_22, %c0_23], %32 {strides = array<i32>} : memref<4x8x8xf32, #tpu.memory_space<vmem>>, vector<1x8x8xf32>,
      %33 = vector.extract_strided_slice %24 {offsets = [0, 16], sizes = [8, 8], strides = [1, 1]} : vector<8x32xf32> to vector<8x8xf32>
      %c2 = arith.constant 2 : index
      %c0_24 = arith.constant 0 : index
      %c0_25 = arith.constant 0 : index
      %34 = vector.load %arg11[%c2, %c0_24, %c0_25] : memref<4x8x8xf32, #tpu.memory_space<vmem>>, vector<1x8x8xf32>
      %35 = vector.shape_cast %34 : vector<1x8x8xf32> to vector<8x8xf32>
      %36 = vector.shape_cast %33 : vector<8x8xf32> to vector<1x8x8xf32>
      tpu.vector_store %arg11[%c2, %c0_24, %c0_25], %36 {strides = array<i32>} : memref<4x8x8xf32, #tpu.memory_space<vmem>>, vector<1x8x8xf32>,
      %37 = vector.extract_strided_slice %24 {offsets = [0, 24], sizes = [8, 8], strides = [1, 1]} : vector<8x32xf32> to vector<8x8xf32>
      %c3 = arith.constant 3 : index
      %c0_26 = arith.constant 0 : index
      %c0_27 = arith.constant 0 : index
      %38 = vector.load %arg11[%c3, %c0_26, %c0_27] : memref<4x8x8xf32, #tpu.memory_space<vmem>>, vector<1x8x8xf32>
      %39 = vector.shape_cast %38 : vector<1x8x8xf32> to vector<8x8xf32>
      %40 = vector.shape_cast %37 : vector<8x8xf32> to vector<1x8x8xf32>
      tpu.vector_store %arg11[%c3, %c0_26, %c0_27], %40 {strides = array<i32>} : memref<4x8x8xf32, #tpu.memory_space<vmem>>, vector<1x8x8xf32>,
    } else {
    }
    %c0_i32_2 = arith.constant 0 : i32
    %5 = arith.cmpi eq, %arg2, %c0_i32_2 : i32
    %6 = arith.extui %5 : i1 to i32
    %c0_i32_3 = arith.constant 0 : i32
    %7 = arith.cmpi ne, %6, %c0_i32_3 : i32
    scf.if %7 {
      %c0_11 = arith.constant 0 : index
      %c0_12 = arith.constant 0 : index
      %c0_13 = arith.constant 0 : index
      %18 = vector.load %arg3[%c0_11, %c0_12, %c0_13] : memref<1x16x32xf32, #tpu.memory_space<vmem>>, vector<1x16x32xf32>
      %19 = vector.shape_cast %18 : vector<1x16x32xf32> to vector<16x32xf32>
      %c0_14 = arith.constant 0 : index
      %c0_15 = arith.constant 0 : index
      %20 = vector.load %arg5[%c0_14, %c0_15] : memref<32x32xf32, #tpu.memory_space<vmem>>, vector<32x32xf32>
      %cst_16 = arith.constant dense<0.000000e+00> : vector<16x32xf32>
      %21 = tpu.matmul %19, %20, %cst_16 {dimension_numbers = #tpu.dot_dimension_numbers<[1], [0], [0], [1], [0, 0, 1, 1], [], []>} : vector<16x32xf32>, vector<32x32xf32>, vector<16x32xf32> -> vector<16x32xf32>
      %c0_17 = arith.constant 0 : index
      %c0_18 = arith.constant 0 : index
      %22 = vector.load %arg7[%c0_17, %c0_18] : memref<1x32xf32, #tpu.memory_space<vmem>>, vector<1x32xf32>
      %23 = vector.broadcast %22 : vector<1x32xf32> to vector<16x32xf32>
      %24 = arith.addf %21, %23 : vector<16x32xf32>
      %cst_19 = arith.constant 0.353553385 : f32
      %25 = vector.broadcast %cst_19 : f32 to vector<16x32xf32>
      %26 = arith.mulf %24, %25 : vector<16x32xf32>
      %27 = vector.extract_strided_slice %26 {offsets = [0, 0], sizes = [16, 8], strides = [1, 1]} : vector<16x32xf32> to vector<16x8xf32>
      %c0_20 = arith.constant 0 : index
      %c0_21 = arith.constant 0 : index
      %c0_22 = arith.constant 0 : index
      %28 = vector.load %arg10[%c0_20, %c0_21, %c0_22] : memref<4x16x8xf32, #tpu.memory_space<vmem>>, vector<1x16x8xf32>
      %29 = vector.shape_cast %28 : vector<1x16x8xf32> to vector<16x8xf32>
      %30 = vector.shape_cast %27 : vector<16x8xf32> to vector<1x16x8xf32>
      tpu.vector_store %arg10[%c0_20, %c0_21, %c0_22], %30 {strides = array<i32>} : memref<4x16x8xf32, #tpu.memory_space<vmem>>, vector<1x16x8xf32>,
      %31 = vector.extract_strided_slice %26 {offsets = [0, 8], sizes = [16, 8], strides = [1, 1]} : vector<16x32xf32> to vector<16x8xf32>
      %c1 = arith.constant 1 : index
      %c0_23 = arith.constant 0 : index
      %c0_24 = arith.constant 0 : index
      %32 = vector.load %arg10[%c1, %c0_23, %c0_24] : memref<4x16x8xf32, #tpu.memory_space<vmem>>, vector<1x16x8xf32>
      %33 = vector.shape_cast %32 : vector<1x16x8xf32> to vector<16x8xf32>
      %34 = vector.shape_cast %31 : vector<16x8xf32> to vector<1x16x8xf32>
      tpu.vector_store %arg10[%c1, %c0_23, %c0_24], %34 {strides = array<i32>} : memref<4x16x8xf32, #tpu.memory_space<vmem>>, vector<1x16x8xf32>,
      %35 = vector.extract_strided_slice %26 {offsets = [0, 16], sizes = [16, 8], strides = [1, 1]} : vector<16x32xf32> to vector<16x8xf32>
      %c2 = arith.constant 2 : index
      %c0_25 = arith.constant 0 : index
      %c0_26 = arith.constant 0 : index
      %36 = vector.load %arg10[%c2, %c0_25, %c0_26] : memref<4x16x8xf32, #tpu.memory_space<vmem>>, vector<1x16x8xf32>
      %37 = vector.shape_cast %36 : vector<1x16x8xf32> to vector<16x8xf32>
      %38 = vector.shape_cast %35 : vector<16x8xf32> to vector<1x16x8xf32>
      tpu.vector_store %arg10[%c2, %c0_25, %c0_26], %38 {strides = array<i32>} : memref<4x16x8xf32, #tpu.memory_space<vmem>>, vector<1x16x8xf32>,
      %39 = vector.extract_strided_slice %26 {offsets = [0, 24], sizes = [16, 8], strides = [1, 1]} : vector<16x32xf32> to vector<16x8xf32>
      %c3 = arith.constant 3 : index
      %c0_27 = arith.constant 0 : index
      %c0_28 = arith.constant 0 : index
      %40 = vector.load %arg10[%c3, %c0_27, %c0_28] : memref<4x16x8xf32, #tpu.memory_space<vmem>>, vector<1x16x8xf32>
      %41 = vector.shape_cast %40 : vector<1x16x8xf32> to vector<16x8xf32>
      %42 = vector.shape_cast %39 : vector<16x8xf32> to vector<1x16x8xf32>
      tpu.vector_store %arg10[%c3, %c0_27, %c0_28], %42 {strides = array<i32>} : memref<4x16x8xf32, #tpu.memory_space<vmem>>, vector<1x16x8xf32>,
    } else {
    }
    %8 = arith.index_cast %arg2 : i32 to index
    %c0 = arith.constant 0 : index
    %c0_4 = arith.constant 0 : index
    %9 = vector.load %arg10[%8, %c0, %c0_4] : memref<4x16x8xf32, #tpu.memory_space<vmem>>, vector<1x16x8xf32>
    %10 = vector.shape_cast %9 : vector<1x16x8xf32> to vector<16x8xf32>
    %11 = arith.index_cast %arg2 : i32 to index
    %c0_5 = arith.constant 0 : index
    %c0_6 = arith.constant 0 : index
    %12 = vector.load %arg11[%11, %c0_5, %c0_6] : memref<4x8x8xf32, #tpu.memory_space<vmem>>, vector<1x8x8xf32>
    %13 = vector.shape_cast %12 : vector<1x8x8xf32> to vector<8x8xf32>
    %cst = arith.constant dense<0.000000e+00> : vector<16x8xf32>
    %14 = tpu.matmul %10, %13, %cst {dimension_numbers = #tpu.dot_dimension_numbers<[1], [1], [0], [0], [0, 0, 1, 0], [], []>} : vector<16x8xf32>, vector<8x8xf32>, vector<16x8xf32> -> vector<16x8xf32>
    %c0_7 = arith.constant 0 : index
    %c0_8 = arith.constant 0 : index
    %c0_9 = arith.constant 0 : index
    %c0_10 = arith.constant 0 : index
    %15 = vector.load %arg9[%c0_7, %c0_8, %c0_9, %c0_10] : memref<1x1x16x8xf32, #tpu.memory_space<vmem>>, vector<1x1x16x8xf32>
    %16 = vector.shape_cast %15 : vector<1x1x16x8xf32> to vector<16x8xf32>
    %17 = vector.shape_cast %14 : vector<16x8xf32> to vector<1x1x16x8xf32>
    tpu.vector_store %arg9[%c0_7, %c0_8, %c0_9, %c0_10], %17 {strides = array<i32>} : memref<1x1x16x8xf32, #tpu.memory_space<vmem>>, vector<1x1x16x8xf32>,
    return
  }
  func.func @transform_0(%arg0: i32, %arg1: i32, %arg2: i32) -> (i32, i32, i32) {
    %c0_i32 = arith.constant 0 : i32
    %c0_i32_0 = arith.constant 0 : i32
    return %arg0, %arg1, %c0_i32 : i32, i32, i32
  }
  func.func @transform_1(%arg0: i32, %arg1: i32, %arg2: i32) -> (i32, i32, i32) {
    %c0_i32 = arith.constant 0 : i32
    %c0_i32_0 = arith.constant 0 : i32
    %c0_i32_1 = arith.constant 0 : i32
    return %arg0, %c0_i32, %c0_i32_0 : i32, i32, i32
  }
  func.func @transform_2(%arg0: i32, %arg1: i32, %arg2: i32) -> (i32, i32) {
    %c0_i32 = arith.constant 0 : i32
    %c0_i32_0 = arith.constant 0 : i32
    %c0_i32_1 = arith.constant 0 : i32
    return %c0_i32, %c0_i32_0 : i32, i32
  }
  func.func @transform_3(%arg0: i32, %arg1: i32, %arg2: i32) -> (i32, i32) {
    %c0_i32 = arith.constant 0 : i32
    %c0_i32_0 = arith.constant 0 : i32
    %c0_i32_1 = arith.constant 0 : i32
    return %c0_i32, %c0_i32_0 : i32, i32
  }
  func.func @transform_4(%arg0: i32, %arg1: i32, %arg2: i32) -> (i32, i32) {
    %c0_i32 = arith.constant 0 : i32
    %c0_i32_0 = arith.constant 0 : i32
    %c0_i32_1 = arith.constant 0 : i32
    return %c0_i32, %c0_i32_0 : i32, i32
  }
  func.func @transform_5(%arg0: i32, %arg1: i32, %arg2: i32) -> (i32, i32) {
    %c0_i32 = arith.constant 0 : i32
    %c0_i32_0 = arith.constant 0 : i32
    %c0_i32_1 = arith.constant 0 : i32
    return %c0_i32, %c0_i32_0 : i32, i32
  }
  func.func @transform_6(%arg0: i32, %arg1: i32, %arg2: i32) -> (i32, i32, i32, i32) {
    %c0_i32 = arith.constant 0 : i32
    %c0_i32_0 = arith.constant 0 : i32
    return %arg0, %arg2, %arg1, %c0_i32 : i32, i32, i32, i32
  }
}

</mosaic_0001>

<llo_original>
// kernel: tpu_custom_call.1
$region0: #{tpu_custom_call.1}
  #allocation0 [shape = 'u32[]', space=smem, size = 0x4, offset = 0x4, fixed_abs, tag = 'smem constant byte address 0x4 - core index']
  #allocation1 [shape = 'u32[144,128]{1,0:T(1,128)}', space=vmem, size = 0x12000, scoped, tag = 'internal scratch']
  #allocation2 [shape = 'f32[4,16,8]{2,1,0:T(8,128)}', space=vmem, size = 0x8000, scoped, tag = 'scratch operand']
  #allocation3 [shape = 'f32[4,8,8]{2,1,0:T(8,128)}', space=vmem, size = 0x4000, scoped, tag = 'scratch operand']
  %s0 = inlined_call_operand.hbm [shape: f32[2,16,32], index: 0, kind: input, shape index: {}]
  %s1 = inlined_call_operand.hbm [shape: f32[2,8,32], index: 1, kind: input, shape index: {}]
  %s2 = inlined_call_operand.hbm [shape: f32[32,32], index: 2, kind: input, shape index: {}]
  %s3 = inlined_call_operand.hbm [shape: f32[32,32], index: 3, kind: input, shape index: {}]
  %s4 = inlined_call_operand.vmem [shape: f32[1,32], index: 4, kind: input, shape index: {}]
  %s5 = inlined_call_operand.vmem [shape: f32[1,32], index: 5, kind: input, shape index: {}]
  %s6 = inlined_call_operand.vmem [shape: f32[2,4,16,8], index: 6, kind: output, shape index: {}]
  %s7 = sld [smem:[#allocation0]]
  $region81: #{tpu_custom_call.1} parent=0
    _
  %s9 = ssub.s32 1, %s7
  %s10 = scalar_select 0, %s9, %s7
  $region1: #{tpu_custom_call.1} parent=0
    #allocation4 [shape = 'u8[16384]{0}', space=vmem, size = 0x4000, scoped, tag = 'input window, operand 0']
    #allocation5 [shape = 's32[2]{0}', space=sflag, size = 0x8, scoped, tag = 'scoped memory for tpu_custom_call.1']
    #allocation6 [shape = 'u8[8192]{0}', space=vmem, size = 0x2000, scoped, tag = 'input window, operand 1']
    #allocation7 [shape = 's32[2]{0}', space=sflag, size = 0x8, scoped, tag = 'scoped memory for tpu_custom_call.1']
    #allocation8 [shape = 'u8[16384]{0}', space=vmem, size = 0x4000, scoped, tag = 'input window, operand 2, single buffered']
    #allocation9 [shape = 'u8[16384]{0}', space=vmem, size = 0x4000, scoped, tag = 'input window, operand 3, single buffered']
    #allocation10 [shape = 's32[1]{0}', space=sflag, size = 0x4, scoped, tag = 'scoped memory for tpu_custom_call.1']
    %11 = vsyncpa [#allocation5], 0
    %s12 = scalar_lea.sflag [#allocation5], 1
    %13 = vsyncpa %s12, 0
    %14 = vsyncpa [#allocation7], 0
    %s15 = scalar_lea.sflag [#allocation7], 1
    %16 = vsyncpa %s15, 0
    %17 = vsyncpa [#allocation10], 0
    loop: start=0, step=1, limit=10
    $region2: #{tpu_custom_call.1} parent=1 // loop_pre_header
      _
    $region3: #{tpu_custom_call.1} parent=1 // loop_header
      %s19 = sphi 0, %s23
      %p20 = scmp.ge.s32.totalorder %s19, 10
      %s26 = sphi 0, %s45
      %s27 = sphi 0, %s41
      %s28 = sphi 0, %s37
      %s29 = sphi 0, %s26
      %s30 = sphi 0, %s27
      %s31 = sphi 0, %s28
      %s32 = sphi 0, %s29
      %s33 = sphi 0, %s30
      %s34 = sphi 0, %s31
      %s50 = sphi 0, %s52
      %s53 = sphi 0, %s50
      %s54 = sphi 0, %s53
      %s70 = sphi 0, %s54
      %s76 = sphi 0, %s78
      %s79 = sphi 0, %s76
      %s80 = sphi 0, %s79
      %s96 = sphi 0, %s80
      %s100 = sphi 0, %s100
      %s102 = sphi 0, %s100
      %s103 = sphi 0, %s102
      %s117 = sphi 0, %s103
      %s121 = sphi 0, %s121
      %s123 = sphi 0, %s121
      %s124 = sphi 0, %s123
      %s138 = sphi 0, %s124
      %s142 = sphi 0, %s142
      %s144 = sphi 0, %s142
      %s145 = sphi 0, %s144
      %s159 = sphi 0, %s145
      %s163 = sphi 0, %s163
      %s165 = sphi 0, %s163
      %s166 = sphi 0, %s165
      %s180 = sphi 0, %s166
      %s190 = sphi 0, %s192
      %s193 = sphi 0, %s190
      %s194 = sphi 0, %s193
      %s210 = sphi 0, %s194
    $region4: #{tpu_custom_call.1} parent=1 // loop_header_branch
      %22 = sbr.rel (%p20) target = $region8
    $region5: #{tpu_custom_call.1} parent=1 // loop_body
      %s24 = ssub.s32 %s19, 1
      %s25 = ssub.s32 %s19, 2
      %s35 = sadd.s32 1, %s28
      %p36 = scmp.ge.s32.totalorder %s35, 4
      %s37 = scalar_select %p36, 0, %s35
      %s38 = sadd.s32 1, %s27
      %s39 = scalar_select %p36, %s38, %s27
      %p40 = scmp.ge.s32.totalorder %s39, 1
      %s41 = scalar_select %p40, 0, %s39
      %s42 = sadd.s32 1, %s26
      %s43 = scalar_select %p40, %s42, %s26
      %p44 = scmp.ge.s32.totalorder %s43, 2
      %s45 = scalar_select %p44, 0, %s43
      %s46 = ssub.s32 %s26, %s45
      %s47 = ssub.s32 %s27, %s41
      %s48 = sor.u32 %s46, %s47
      %p49 = scmp.eq.s32.totalorder %s48, 0
      %s51 = sadd.s32 %s50, 1
      %s52 = scalar_select %p49, %s50, %s51
      %p55 = pneg %p49
      %p56 = scmp.eq.s32.totalorder %s19, 7
      %p57 = por %p55, %p56
      %p58 = scmp.ne.s32.totalorder %s50, %s53
      %p59 = scmp.eq.s32.totalorder %s19, 0
      %p60 = por %p58, %p59
      %p61 = scmp.ne.s32.totalorder %s50, %s53
      %p62 = scmp.eq.s32.totalorder %s24, 7
      %p63 = por %p61, %p62
      %p64 = scmp.ne.s32.totalorder %s53, %s54
      %p65 = scmp.eq.s32.totalorder %s24, 0
      %p66 = por %p64, %p65
      %p67 = scmp.ne.s32.totalorder %s53, %s54
      %p68 = scmp.eq.s32.totalorder %s25, 7
      %p69 = por %p67, %p68
      %p71 = scmp.ne.s32.totalorder %s54, %s70
      %p72 = scmp.eq.s32.totalorder %s25, 0
      %p73 = por %p71, %p72
      %s74 = ssub.s32 %s26, %s45
      %p75 = scmp.eq.s32.totalorder %s74, 0
      %s77 = sadd.s32 %s76, 1
      %s78 = scalar_select %p75, %s76, %s77
      %p81 = pneg %p75
      %p82 = scmp.eq.s32.totalorder %s19, 7
      %p83 = por %p81, %p82
      %p84 = scmp.ne.s32.totalorder %s76, %s79
      %p85 = scmp.eq.s32.totalorder %s19, 0
      %p86 = por %p84, %p85
      %p87 = scmp.ne.s32.totalorder %s76, %s79
      %p88 = scmp.eq.s32.totalorder %s24, 7
      %p89 = por %p87, %p88
      %p90 = scmp.ne.s32.totalorder %s79, %s80
      %p91 = scmp.eq.s32.totalorder %s24, 0
      %p92 = por %p90, %p91
      %p93 = scmp.ne.s32.totalorder %s79, %s80
      %p94 = scmp.eq.s32.totalorder %s25, 7
      %p95 = por %p93, %p94
      %p97 = scmp.ne.s32.totalorder %s80, %s96
      %p98 = scmp.eq.s32.totalorder %s25, 0
      %p99 = por %p97, %p98
      %s101 = sadd.s32 %s100, 1
      %p104 = scmp.eq.s32.totalorder %s19, 7
      %p105 = scmp.ne.s32.totalorder %s100, %s102
      %p106 = scmp.eq.s32.totalorder %s19, 0
      %p107 = por %p105, %p106
      %p108 = scmp.ne.s32.totalorder %s100, %s102
      %p109 = scmp.eq.s32.totalorder %s24, 7
      %p110 = por %p108, %p109
      %p111 = scmp.ne.s32.totalorder %s102, %s103
      %p112 = scmp.eq.s32.totalorder %s24, 0
      %p113 = por %p111, %p112
      %p114 = scmp.ne.s32.totalorder %s102, %s103
      %p115 = scmp.eq.s32.totalorder %s25, 7
      %p116 = por %p114, %p115
      %p118 = scmp.ne.s32.totalorder %s103, %s117
      %p119 = scmp.eq.s32.totalorder %s25, 0
      %p120 = por %p118, %p119
      %s122 = sadd.s32 %s121, 1
      %p125 = scmp.eq.s32.totalorder %s19, 7
      %p126 = scmp.ne.s32.totalorder %s121, %s123
      %p127 = scmp.eq.s32.totalorder %s19, 0
      %p128 = por %p126, %p127
      %p129 = scmp.ne.s32.totalorder %s121, %s123
      %p130 = scmp.eq.s32.totalorder %s24, 7
      %p131 = por %p129, %p130
      %p132 = scmp.ne.s32.totalorder %s123, %s124
      %p133 = scmp.eq.s32.totalorder %s24, 0
      %p134 = por %p132, %p133
      %p135 = scmp.ne.s32.totalorder %s123, %s124
      %p136 = scmp.eq.s32.totalorder %s25, 7
      %p137 = por %p135, %p136
      %p139 = scmp.ne.s32.totalorder %s124, %s138
      %p140 = scmp.eq.s32.totalorder %s25, 0
      %p141 = por %p139, %p140
      %s143 = sadd.s32 %s142, 1
      %p146 = scmp.eq.s32.totalorder %s19, 7
      %p147 = scmp.ne.s32.totalorder %s142, %s144
      %p148 = scmp.eq.s32.totalorder %s19, 0
      %p149 = por %p147, %p148
      %p150 = scmp.ne.s32.totalorder %s142, %s144
      %p151 = scmp.eq.s32.totalorder %s24, 7
      %p152 = por %p150, %p151
      %p153 = scmp.ne.s32.totalorder %s144, %s145
      %p154 = scmp.eq.s32.totalorder %s24, 0
      %p155 = por %p153, %p154
      %p156 = scmp.ne.s32.totalorder %s144, %s145
      %p157 = scmp.eq.s32.totalorder %s25, 7
      %p158 = por %p156, %p157
      %p160 = scmp.ne.s32.totalorder %s145, %s159
      %p161 = scmp.eq.s32.totalorder %s25, 0
      %p162 = por %p160, %p161
      %s164 = sadd.s32 %s163, 1
      %p167 = scmp.eq.s32.totalorder %s19, 7
      %p168 = scmp.ne.s32.totalorder %s163, %s165
      %p169 = scmp.eq.s32.totalorder %s19, 0
      %p170 = por %p168, %p169
      %p171 = scmp.ne.s32.totalorder %s163, %s165
      %p172 = scmp.eq.s32.totalorder %s24, 7
      %p173 = por %p171, %p172
      %p174 = scmp.ne.s32.totalorder %s165, %s166
      %p175 = scmp.eq.s32.totalorder %s24, 0
      %p176 = por %p174, %p175
      %p177 = scmp.ne.s32.totalorder %s165, %s166
      %p178 = scmp.eq.s32.totalorder %s25, 7
      %p179 = por %p177, %p178
      %p181 = scmp.ne.s32.totalorder %s166, %s180
      %p182 = scmp.eq.s32.totalorder %s25, 0
      %p183 = por %p181, %p182
      %s184 = ssub.s32 %s26, %s45
      %s185 = ssub.s32 %s28, %s37
      %s186 = sor.u32 %s184, %s185
      %s187 = ssub.s32 %s27, %s41
      %s188 = sor.u32 %s186, %s187
      %p189 = scmp.eq.s32.totalorder %s188, 0
      %s191 = sadd.s32 %s190, 1
      %s192 = scalar_select %p189, %s190, %s191
      %p195 = pneg %p189
      %p196 = scmp.eq.s32.totalorder %s19, 7
      %p197 = por %p195, %p196
      %p198 = scmp.ne.s32.totalorder %s190, %s193
      %p199 = scmp.eq.s32.totalorder %s19, 0
      %p200 = por %p198, %p199
      %p201 = scmp.ne.s32.totalorder %s190, %s193
      %p202 = scmp.eq.s32.totalorder %s24, 7
      %p203 = por %p201, %p202
      %p204 = scmp.ne.s32.totalorder %s193, %s194
      %p205 = scmp.eq.s32.totalorder %s24, 0
      %p206 = por %p204, %p205
      %p207 = scmp.ne.s32.totalorder %s193, %s194
      %p208 = scmp.eq.s32.totalorder %s25, 7
      %p209 = por %p207, %p208
      %p211 = scmp.ne.s32.totalorder %s194, %s210
      %p212 = scmp.eq.s32.totalorder %s25, 0
      %p213 = por %p211, %p212
      %p214 = scmp.le.s32.totalorder 1, %s19
      %p215 = scmp.lt.s32.totalorder %s19, 9
      %p216 = pnand %p214, %p215
      %p217 = pneg %p216
      // Predicated region
      $region9: #{tpu_custom_call.1} parent=5 // pred_check
        _
      $region10: #{tpu_custom_call.1} parent=5 // pred_check_branch
        %219 = sbr.rel (%p216) target = $region12
      $region11: #{tpu_custom_call.1} parent=5 // pred_region
        %s220 = ssub.s32 %s19, 1
        // Predicated region
        $region13: #{tpu_custom_call.1} parent=11 // pred_check
          %p221 = pneg %p113
        $region14: #{tpu_custom_call.1} parent=11 // pred_check_branch
          %223 = sbr.rel (%p221) target = $region16
        $region15: #{tpu_custom_call.1} parent=11 // pred_region
          %s225 = ssub.s32 512, 512
          %226 = vsyncadd [#allocation7], %s225
          %s227 = sshll.u32 [#allocation8], 4
          %s228 = int_to_ptr.vmem [resolvable:$true] %s227
          %233 = dma.hbm_to_vmem [thread:$0]  %s2, 512, %s228, [#allocation7], 128, 128, 8
        $region16: #{tpu_custom_call.1} parent=11 // pred_fallthru
          _
        // Predicated region
        $region17: #{tpu_custom_call.1} parent=11 // pred_check
          %p234 = pneg %p134
        $region18: #{tpu_custom_call.1} parent=11 // pred_check_branch
          %236 = sbr.rel (%p234) target = $region20
        $region19: #{tpu_custom_call.1} parent=11 // pred_region
          %s238 = ssub.s32 512, 512
          %239 = vsyncadd [#allocation10], %s238
          %s240 = sshll.u32 [#allocation9], 4
          %s241 = int_to_ptr.vmem [resolvable:$true] %s240
          %246 = dma.hbm_to_vmem [thread:$0]  %s3, 512, %s241, [#allocation10], 128, 128, 8
        $region20: #{tpu_custom_call.1} parent=11 // pred_fallthru
          _
        // Predicated region
        $region21: #{tpu_custom_call.1} parent=11 // pred_check
          %p247 = pneg %p155
        $region22: #{tpu_custom_call.1} parent=11 // pred_check_branch
          %249 = sbr.rel (%p247) target = $region24
        $region23: #{tpu_custom_call.1} parent=11 // pred_region
          _
        $region24: #{tpu_custom_call.1} parent=11 // pred_fallthru
          _
        // Predicated region
        $region25: #{tpu_custom_call.1} parent=11 // pred_check
          %p250 = pneg %p176
        $region26: #{tpu_custom_call.1} parent=11 // pred_check_branch
          %252 = sbr.rel (%p250) target = $region28
        $region27: #{tpu_custom_call.1} parent=11 // pred_region
          _
        $region28: #{tpu_custom_call.1} parent=11 // pred_fallthru
          _
      $region12: #{tpu_custom_call.1} parent=5 // pred_fallthru
        _
      %p253 = scmp.lt.s32.totalorder %s19, 8
      // Predicated region
      $region29: #{tpu_custom_call.1} parent=5 // pred_check
        %p254 = pneg %p253
      $region30: #{tpu_custom_call.1} parent=5 // pred_check_branch
        %256 = sbr.rel (%p254) target = $region32
      $region31: #{tpu_custom_call.1} parent=5 // pred_region
        // Predicated region
        $region33: #{tpu_custom_call.1} parent=31 // pred_check
          %p257 = pneg %p60
        $region34: #{tpu_custom_call.1} parent=31 // pred_check_branch
          %259 = sbr.rel (%p257) target = $region36
        $region35: #{tpu_custom_call.1} parent=31 // pred_region
          %s260 = sand.u32 %s50, 1
          %s261 = scalar_lea.sflag [#allocation5], %s260
          %s262 = sand.u32 %s50, 1
          %s263 = smul.addr %s262, 16
          %s264 = scalar_lea.vmem [#allocation4], %s263
          %s265 = smul.u32 2, %s27
          %s267 = ssub.s32 256, 256
          %268 = vsyncadd %s261, %s267
          %s269 = smul.addr %s26, 2
          %s270 = sadd.s32 %s265, %s269
          %s271 = smul.addr %s270, 128
          %s272 = scalar_lea.hbm %s0, %s271
          %s273 = sshll.u32 %s264, 4
          %s274 = int_to_ptr.vmem [resolvable:$true] %s273
          %279 = dma.hbm_to_vmem [thread:$0]  %s272, 256, %s274, %s261, 128, 128, 8
        $region36: #{tpu_custom_call.1} parent=31 // pred_fallthru
          _
        // Predicated region
        $region37: #{tpu_custom_call.1} parent=31 // pred_check
          %p280 = pneg %p86
        $region38: #{tpu_custom_call.1} parent=31 // pred_check_branch
          %282 = sbr.rel (%p280) target = $region40
        $region39: #{tpu_custom_call.1} parent=31 // pred_region
          %s283 = sand.u32 %s19, 1
          %s284 = scalar_lea.sflag [#allocation7], %s283
          %s285 = sand.u32 %s76, 1
          %s286 = smul.addr %s285, 8
          %s287 = scalar_lea.vmem [#allocation6], %s286
          %s289 = ssub.s32 128, 128
          %290 = vsyncadd %s284, %s289
          %s291 = smul.addr %s26, 128
          %s292 = scalar_lea.hbm %s1, %s291
          %s294 = sshll.u32 %s287, 4
          %s295 = int_to_ptr.vmem [resolvable:$true] %s294
          %297 = dma.hbm_to_vmem [thread:$0]  %s292, 128, %s295, %s284
        $region40: #{tpu_custom_call.1} parent=31 // pred_fallthru
          _
      $region32: #{tpu_custom_call.1} parent=5 // pred_fallthru
        _
      %p298 = scmp.le.s32.totalorder 1, %s19
      %p299 = scmp.lt.s32.totalorder %s19, 9
      %p300 = pnand %p298, %p299
      %p301 = pneg %p300
      // Predicated region
      $region41: #{tpu_custom_call.1} parent=5 // pred_check
        _
      $region42: #{tpu_custom_call.1} parent=5 // pred_check_branch
        %303 = sbr.rel (%p300) target = $region44
      $region43: #{tpu_custom_call.1} parent=5 // pred_region
        %s304 = ssub.s32 %s19, 1
        %s305 = sand.u32 %s53, 1
        %s306 = scalar_lea.sflag [#allocation5], %s305
        %s307 = sand.u32 %s53, 1
        %s308 = smul.addr %s307, 16
        %s309 = scalar_lea.vmem [#allocation4], %s308
        // Predicated region
        $region45: #{tpu_custom_call.1} parent=43 // pred_check
          %p310 = pneg %p66
        $region46: #{tpu_custom_call.1} parent=43 // pred_check_branch
          %312 = sbr.rel (%p310) target = $region48
        $region47: #{tpu_custom_call.1} parent=43 // pred_region
          %313 = dma.done %s306, 256
        $region48: #{tpu_custom_call.1} parent=43 // pred_fallthru
          _
        %s314 = sand.u32 %s24, 1
        %s315 = scalar_lea.sflag [#allocation7], %s314
        %s316 = sand.u32 %s79, 1
        %s317 = smul.addr %s316, 8
        %s318 = scalar_lea.vmem [#allocation6], %s317
        // Predicated region
        $region49: #{tpu_custom_call.1} parent=43 // pred_check
          %p319 = pneg %p92
        $region50: #{tpu_custom_call.1} parent=43 // pred_check_branch
          %321 = sbr.rel (%p319) target = $region52
        $region51: #{tpu_custom_call.1} parent=43 // pred_region
          %322 = dma.done %s315, 128
        $region52: #{tpu_custom_call.1} parent=43 // pred_fallthru
          _
        // Predicated region
        $region53: #{tpu_custom_call.1} parent=43 // pred_check
          %p323 = pneg %p113
        $region54: #{tpu_custom_call.1} parent=43 // pred_check_branch
          %325 = sbr.rel (%p323) target = $region56
        $region55: #{tpu_custom_call.1} parent=43 // pred_region
          %326 = dma.done [#allocation7], 512
        $region56: #{tpu_custom_call.1} parent=43 // pred_fallthru
          _
        // Predicated region
        $region57: #{tpu_custom_call.1} parent=43 // pred_check
          %p327 = pneg %p134
        $region58: #{tpu_custom_call.1} parent=43 // pred_check_branch
          %329 = sbr.rel (%p327) target = $region60
        $region59: #{tpu_custom_call.1} parent=43 // pred_region
          %330 = dma.done [#allocation10], 512
        $region60: #{tpu_custom_call.1} parent=43 // pred_fallthru
          _
        %s331 = sand.u32 %s53, 1
        %s332 = scalar_lea.sflag [#allocation5], %s331
        %s333 = sand.u32 %s53, 1
        %s334 = smul.addr %s333, 16
        %s335 = scalar_lea.vmem [#allocation4], %s334
        %p336 = pneg %p66
        %p337 = pneg %p63
        %s338 = sand.u32 %s24, 1
        %s339 = scalar_lea.sflag [#allocation7], %s338
        %s340 = sand.u32 %s79, 1
        %s341 = smul.addr %s340, 8
        %s342 = scalar_lea.vmem [#allocation6], %s341
        %p343 = pneg %p92
        %p344 = pneg %p89
        %p345 = pneg %p113
        %p346 = pneg %p110
        %p347 = pneg %p134
        %p348 = pneg %p131
        %p349 = pneg %p155
        %p350 = pneg %p152
        %p351 = pneg %p176
        %p352 = pneg %p173
        %p353 = pneg %p206
        %p354 = pneg %p203
        %s355 = smul.u32 2, %s30
        %p356 = scmp.lt.s32.totalorder %s29, 1
        %s357 = scalar_select %p356, %s29, 1
        %p358 = scmp.lt.s32.totalorder %s31, 3
        %s359 = scalar_select %p358, %s31, 3
        %p360 = scmp.lt.s32.totalorder %s355, 1
        %s361 = scalar_select %p360, %s355, 1
        %s362 = smul.addr %s359, 2
        %s363 = sadd.s32 %s361, %s362
        %s364 = smul.addr %s357, 8
        %s365 = sadd.s32 %s363, %s364
        %s366 = smul.addr %s365, 8
        %s367 = scalar_lea.vmem %s6, %s366
        %s368 = smul.u32 2, %s30
        %s369 = smul.u32 2, %s30
        %p370 = scmp.lt.s32.totalorder %s29, 1
        %s371 = scalar_select %p370, %s29, 1
        %p372 = scmp.lt.s32.totalorder %s31, 3
        %s373 = scalar_select %p372, %s31, 3
        %p374 = scmp.lt.s32.totalorder %s369, 1
        %s375 = scalar_select %p374, %s369, 1
        %s376 = smul.addr %s373, 2
        %s377 = sadd.s32 %s375, %s376
        %s378 = smul.addr %s371, 8
        %s379 = sadd.s32 %s377, %s378
        %s380 = smul.addr %s379, 8
        %s381 = scalar_lea.vmem %s6, %s380
        %s382 = smul.u32 2, %s30
        %p383 = scmp.eq.s32.totalorder %s30, 0
        %p384 = scmp.eq.s32.totalorder %s31, 0
        %p385 = pnand %p383, %p384
        %p386 = pneg %p385
        // Predicated region
        $region61: #{tpu_custom_call.1} parent=43 // pred_check
          _
        $region62: #{tpu_custom_call.1} parent=43 // pred_check_branch
          %388 = sbr.rel (%p385) target = $region64
        $region63: #{tpu_custom_call.1} parent=43 // pred_region
          %v389 = vld [vmem:[%s318] sm:$0xff]
          %v390 = vld [vmem:[#allocation9] sm:$0xff]
          %v391 = vld [vmem:[#allocation9 + $0x8] sm:$0xff]
          %v392 = vld [vmem:[#allocation9 + $0x10] sm:$0xff]
          %v393 = vld [vmem:[#allocation9 + $0x18] sm:$0xff]
          %v394 = vld [vmem:[%s5] sm:$0x1]
          %v396 = vlaneseq
          %v397 = vshrl.u32 %v396, 7
          %v398 = vsub.s32 0, %v397
          %v399 = vrot.slane %v394, %v398
          %vm401 = vcmask 261120
          %v403 = vsel %vm401, %v389, 0
          %405 = vmatprep.subr.mxu0 0.0
          %406 = vmatpush1.msra.mxu0 0.0
          %407 = vmatprep.subr.mxu0 0.0
          %408 = vmatpush1.msra.mxu0 0.0
          %409 = vmatprep.subr.mxu0 0.0
          %410 = vmatpush1.msra.mxu0 0.0
          %411 = vmatprep.subr.mxu0 0.0
          %412 = vmatpush1.msra.mxu0 0.0
          %413 = vmatprep.subr.mxu0 0.0
          %414 = vmatpush1.msra.mxu0 0.0
          %415 = vmatprep.subr.mxu0 0.0
          %416 = vmatpush1.msra.mxu0 0.0
          %417 = vmatprep.subr.mxu0 0.0
          %418 = vmatpush1.msra.mxu0 0.0
          %419 = vmatprep.subr.mxu0 0.0
          %420 = vmatpush1.msra.mxu0 0.0
          %421 = vmatprep.subr.mxu0 0.0
          %422 = vmatpush1.msra.mxu0 0.0
          %423 = vmatprep.subr.mxu0 0.0
          %424 = vmatpush1.msra.mxu0 0.0
          %425 = vmatprep.subr.mxu0 0.0
          %426 = vmatpush1.msra.mxu0 0.0
          %427 = vmatprep.subr.mxu0 0.0
          %428 = vmatpush1.msra.mxu0 0.0
          %429 = vmatprep.subr.mxu0 0.0
          %430 = vmatpush1.msra.mxu0 %v393
          %431 = vmatprep.subr.mxu0 0.0
          %432 = vmatpush1.msra.mxu0 %v392
          %433 = vmatprep.subr.mxu0 0.0
          %434 = vmatpush1.msra.mxu0 %v391
          %435 = vmatprep.subr.mxu0 0.0
          %436 = vmatpush1.msra.mxu0 %v390
          %437 = vmatprep.subr.mxu0 0.0
          %438 = vmatpush2.msra.mxu0 0.0
          %439 = vmatprep.subr.mxu0 0.0
          %440 = vmatpush2.msra.mxu0 0.0
          %441 = vmatprep.subr.mxu0 0.0
          %442 = vmatpush2.msra.mxu0 0.0
          %443 = vmatprep.subr.mxu0 0.0
          %444 = vmatpush2.msra.mxu0 0.0
          %445 = vmatprep.subr.mxu0 0.0
          %446 = vmatpush2.msra.mxu0 0.0
          %447 = vmatprep.subr.mxu0 0.0
          %448 = vmatpush2.msra.mxu0 0.0
          %449 = vmatprep.subr.mxu0 0.0
          %450 = vmatpush2.msra.mxu0 0.0
          %451 = vmatprep.subr.mxu0 0.0
          %452 = vmatpush2.msra.mxu0 0.0
          %453 = vmatprep.subr.mxu0 0.0
          %454 = vmatpush2.msra.mxu0 0.0
          %455 = vmatprep.subr.mxu0 0.0
          %456 = vmatpush2.msra.mxu0 0.0
          %457 = vmatprep.subr.mxu0 0.0
          %458 = vmatpush2.msra.mxu0 0.0
          %459 = vmatprep.subr.mxu0 0.0
          %460 = vmatpush2.msra.mxu0 0.0
          %461 = vmatprep.subr.mxu0 0.0
          %462 = vmatpush2.msra.mxu0 0.0
          %463 = vmatprep.subr.mxu0 0.0
          %464 = vmatpush2.msra.mxu0 0.0
          %465 = vmatprep.subr.mxu0 0.0
          %466 = vmatpush2.msra.mxu0 0.0
          %467 = vmatprep.subr.mxu0 0.0
          %468 = vmatpush2.msra.mxu0 0.0
          %469 = vmatprep.mubr.f32.mxu0 0.0
          %470 = vmatmul.mubr.f32.gmra.mxu0 %v403
          %v471 = vpop.f32.mrf.mxu0
          %v472 = vadd.f32 %v399, %v471
          %v473 = vpop.f32.mrf.mxu0
          %474 = vdwg.mxu0
          %vm475 = vcmask 64512
          %476 = vst.msk [vmem:[#allocation3] sm:$0xff] %vm475, %v472
          %478 = vrot.lane.b32.xlu0 %v472, 120
          %v479 = vpop.permute.xlu0 %478
          %s481 = scalar_lea.vmem [#allocation3], 8
          %482 = vst.msk [vmem:[%s481] sm:$0xff] %vm475, %v479
          %483 = vrot.lane.b32.xlu0 %v472, 112
          %v484 = vpop.permute.xlu0 %483
          %s486 = scalar_lea.vmem [#allocation3], 16
          %487 = vst.msk [vmem:[%s486] sm:$0xff] %vm475, %v484
          %488 = vrot.lane.b32.xlu0 %v472, 104
          %v489 = vpop.permute.xlu0 %488
          %s491 = scalar_lea.vmem [#allocation3], 24
          %492 = vst.msk [vmem:[%s491] sm:$0xff] %vm475, %v489
        $region64: #{tpu_custom_call.1} parent=43 // pred_fallthru
          _
        // Predicated region
        $region65: #{tpu_custom_call.1} parent=43 // pred_check
          %p493 = pneg %p384
        $region66: #{tpu_custom_call.1} parent=43 // pred_check_branch
          %495 = sbr.rel (%p493) target = $region68
        $region67: #{tpu_custom_call.1} parent=43 // pred_region
          %v496 = vld [vmem:[%s309] sm:$0xff]
          %v497 = vld [vmem:[%s309 + $0x8] sm:$0xff]
          %v498 = vld [vmem:[#allocation8] sm:$0xff]
          %v499 = vld [vmem:[#allocation8 + $0x8] sm:$0xff]
          %v500 = vld [vmem:[#allocation8 + $0x10] sm:$0xff]
          %v501 = vld [vmem:[#allocation8 + $0x18] sm:$0xff]
          %v502 = vld [vmem:[%s4] sm:$0x1]
          %v504 = vlaneseq
          %v505 = vshrl.u32 %v504, 7
          %v506 = vsub.s32 0, %v505
          %v507 = vrot.slane %v502, %v506
          %vm509 = vcmask 261120
          %v511 = vsel %vm509, %v496, 0
          %v514 = vsel %vm509, %v497, 0
          %516 = vmatprep.subr.mxu0 0.0
          %517 = vmatpush1.msra.mxu0 0.0
          %518 = vmatprep.subr.mxu0 0.0
          %519 = vmatpush1.msra.mxu0 0.0
          %520 = vmatprep.subr.mxu0 0.0
          %521 = vmatpush1.msra.mxu0 0.0
          %522 = vmatprep.subr.mxu0 0.0
          %523 = vmatpush1.msra.mxu0 0.0
          %524 = vmatprep.subr.mxu0 0.0
          %525 = vmatpush1.msra.mxu0 0.0
          %526 = vmatprep.subr.mxu0 0.0
          %527 = vmatpush1.msra.mxu0 0.0
          %528 = vmatprep.subr.mxu0 0.0
          %529 = vmatpush1.msra.mxu0 0.0
          %530 = vmatprep.subr.mxu0 0.0
          %531 = vmatpush1.msra.mxu0 0.0
          %532 = vmatprep.subr.mxu0 0.0
          %533 = vmatpush1.msra.mxu0 0.0
          %534 = vmatprep.subr.mxu0 0.0
          %535 = vmatpush1.msra.mxu0 0.0
          %536 = vmatprep.subr.mxu0 0.0
          %537 = vmatpush1.msra.mxu0 0.0
          %538 = vmatprep.subr.mxu0 0.0
          %539 = vmatpush1.msra.mxu0 0.0
          %540 = vmatprep.subr.mxu0 0.0
          %541 = vmatpush1.msra.mxu0 %v501
          %542 = vmatprep.subr.mxu0 0.0
          %543 = vmatpush1.msra.mxu0 %v500
          %544 = vmatprep.subr.mxu0 0.0
          %545 = vmatpush1.msra.mxu0 %v499
          %546 = vmatprep.subr.mxu0 0.0
          %547 = vmatpush1.msra.mxu0 %v498
          %548 = vmatprep.subr.mxu0 0.0
          %549 = vmatpush2.msra.mxu0 0.0
          %550 = vmatprep.subr.mxu0 0.0
          %551 = vmatpush2.msra.mxu0 0.0
          %552 = vmatprep.subr.mxu0 0.0
          %553 = vmatpush2.msra.mxu0 0.0
          %554 = vmatprep.subr.mxu0 0.0
          %555 = vmatpush2.msra.mxu0 0.0
          %556 = vmatprep.subr.mxu0 0.0
          %557 = vmatpush2.msra.mxu0 0.0
          %558 = vmatprep.subr.mxu0 0.0
          %559 = vmatpush2.msra.mxu0 0.0
          %560 = vmatprep.subr.mxu0 0.0
          %561 = vmatpush2.msra.mxu0 0.0
          %562 = vmatprep.subr.mxu0 0.0
          %563 = vmatpush2.msra.mxu0 0.0
          %564 = vmatprep.subr.mxu0 0.0
          %565 = vmatpush2.msra.mxu0 0.0
          %566 = vmatprep.subr.mxu0 0.0
          %567 = vmatpush2.msra.mxu0 0.0
          %568 = vmatprep.subr.mxu0 0.0
          %569 = vmatpush2.msra.mxu0 0.0
          %570 = vmatprep.subr.mxu0 0.0
          %571 = vmatpush2.msra.mxu0 0.0
          %572 = vmatprep.subr.mxu0 0.0
          %573 = vmatpush2.msra.mxu0 0.0
          %574 = vmatprep.subr.mxu0 0.0
          %575 = vmatpush2.msra.mxu0 0.0
          %576 = vmatprep.subr.mxu0 0.0
          %577 = vmatpush2.msra.mxu0 0.0
          %578 = vmatprep.subr.mxu0 0.0
          %579 = vmatpush2.msra.mxu0 0.0
          %580 = vmatprep.mubr.f32.mxu0 0.0
          %581 = vmatmul.mubr.f32.gmra.mxu0 %v511
          %v582 = vpop.f32.mrf.mxu0
          %v583 = vadd.f32 %v507, %v582
          %v584 = vpop.f32.mrf.mxu0
          %585 = vmatprep.mubr.f32.mxu0 0.0
          %586 = vmatmul.mubr.f32.gmra.mxu0 %v514
          %v587 = vpop.f32.mrf.mxu0
          %v588 = vadd.f32 %v507, %v587
          %v589 = vpop.f32.mrf.mxu0
          %590 = vdwg.mxu0
          %v591 = vmul.f32 %v583, 0.35355338
          %v592 = vmul.f32 %v588, 0.35355338
          %vm593 = vcmask 64512
          %594 = vst.msk [vmem:[#allocation2] sm:$0xff] %vm593, %v591
          %595 = vst.msk [vmem:[#allocation2 + $0x8] sm:$0xff] %vm593, %v592
          %598 = vrot.lane.b32.xlu0 %v591, 120
          %v599 = vpop.permute.xlu0 %598
          %600 = vrot.lane.b32.xlu0 %v592, 120
          %v601 = vpop.permute.xlu0 %600
          %s604 = scalar_lea.vmem [#allocation2], 16
          %605 = vst.msk [vmem:[%s604] sm:$0xff] %vm593, %v599
          %606 = vst.msk [vmem:[%s604 + $0x8] sm:$0xff] %vm593, %v601
          %607 = vrot.lane.b32.xlu0 %v591, 112
          %v608 = vpop.permute.xlu0 %607
          %609 = vrot.lane.b32.xlu0 %v592, 112
          %v610 = vpop.permute.xlu0 %609
          %s613 = scalar_lea.vmem [#allocation2], 32
          %614 = vst.msk [vmem:[%s613] sm:$0xff] %vm593, %v608
          %615 = vst.msk [vmem:[%s613 + $0x8] sm:$0xff] %vm593, %v610
          %616 = vrot.lane.b32.xlu0 %v591, 104
          %v617 = vpop.permute.xlu0 %616
          %618 = vrot.lane.b32.xlu0 %v592, 104
          %v619 = vpop.permute.xlu0 %618
          %s622 = scalar_lea.vmem [#allocation2], 48
          %623 = vst.msk [vmem:[%s622] sm:$0xff] %vm593, %v617
          %624 = vst.msk [vmem:[%s622 + $0x8] sm:$0xff] %vm593, %v619
        $region68: #{tpu_custom_call.1} parent=43 // pred_fallthru
          _
        %s625 = smul.u32 %s31, 16
        %s626 = scalar_lea.vmem [#allocation2], %s625
        %v627 = vld [vmem:[%s626] sm:$0xff]
        %v628 = vld [vmem:[%s626 + $0x8] sm:$0xff]
        %s629 = smul.u32 %s31, 8
        %s630 = scalar_lea.vmem [#allocation3], %s629
        %v631 = vld [vmem:[%s630] sm:$0xff]
        %vm632 = vcmask 64512
        %v634 = vsel %vm632, %v627, 0
        %v637 = vsel %vm632, %v628, 0
        %v640 = vsel %vm632, %v631, 0
        %642 = vmatprep.subr.mxu0 0.0
        %643 = vmatpush1.xpose.msra.mxu0 0.0
        %644 = vmatprep.subr.mxu0 0.0
        %645 = vmatpush1.xpose.msra.mxu0 0.0
        %646 = vmatprep.subr.mxu0 0.0
        %647 = vmatpush1.xpose.msra.mxu0 0.0
        %648 = vmatprep.subr.mxu0 0.0
        %649 = vmatpush1.xpose.msra.mxu0 0.0
        %650 = vmatprep.subr.mxu0 0.0
        %651 = vmatpush1.xpose.msra.mxu0 0.0
        %652 = vmatprep.subr.mxu0 0.0
        %653 = vmatpush1.xpose.msra.mxu0 0.0
        %654 = vmatprep.subr.mxu0 0.0
        %655 = vmatpush1.xpose.msra.mxu0 0.0
        %656 = vmatprep.subr.mxu0 0.0
        %657 = vmatpush1.xpose.msra.mxu0 0.0
        %658 = vmatprep.subr.mxu0 0.0
        %659 = vmatpush1.xpose.msra.mxu0 0.0
        %660 = vmatprep.subr.mxu0 0.0
        %661 = vmatpush1.xpose.msra.mxu0 0.0
        %662 = vmatprep.subr.mxu0 0.0
        %663 = vmatpush1.xpose.msra.mxu0 0.0
        %664 = vmatprep.subr.mxu0 0.0
        %665 = vmatpush1.xpose.msra.mxu0 0.0
        %666 = vmatprep.subr.mxu0 0.0
        %667 = vmatpush1.xpose.msra.mxu0 0.0
        %668 = vmatprep.subr.mxu0 0.0
        %669 = vmatpush1.xpose.msra.mxu0 0.0
        %670 = vmatprep.subr.mxu0 0.0
        %671 = vmatpush1.xpose.msra.mxu0 0.0
        %672 = vmatprep.subr.mxu0 0.0
        %673 = vmatpush1.xpose.msra.mxu0 %v640
        %674 = vmatprep.subr.mxu0 0.0
        %675 = vmatpush2.xpose.msra.mxu0 0.0
        %676 = vmatprep.subr.mxu0 0.0
        %677 = vmatpush2.xpose.msra.mxu0 0.0
        %678 = vmatprep.subr.mxu0 0.0
        %679 = vmatpush2.xpose.msra.mxu0 0.0
        %680 = vmatprep.subr.mxu0 0.0
        %681 = vmatpush2.xpose.msra.mxu0 0.0
        %682 = vmatprep.subr.mxu0 0.0
        %683 = vmatpush2.xpose.msra.mxu0 0.0
        %684 = vmatprep.subr.mxu0 0.0
        %685 = vmatpush2.xpose.msra.mxu0 0.0
        %686 = vmatprep.subr.mxu0 0.0
        %687 = vmatpush2.xpose.msra.mxu0 0.0
        %688 = vmatprep.subr.mxu0 0.0
        %689 = vmatpush2.xpose.msra.mxu0 0.0
        %690 = vmatprep.subr.mxu0 0.0
        %691 = vmatpush2.xpose.msra.mxu0 0.0
        %692 = vmatprep.subr.mxu0 0.0
        %693 = vmatpush2.xpose.msra.mxu0 0.0
        %694 = vmatprep.subr.mxu0 0.0
        %695 = vmatpush2.xpose.msra.mxu0 0.0
        %696 = vmatprep.subr.mxu0 0.0
        %697 = vmatpush2.xpose.msra.mxu0 0.0
        %698 = vmatprep.subr.mxu0 0.0
        %699 = vmatpush2.xpose.msra.mxu0 0.0
        %700 = vmatprep.subr.mxu0 0.0
        %701 = vmatpush2.xpose.msra.mxu0 0.0
        %702 = vmatprep.subr.mxu0 0.0
        %703 = vmatpush2.xpose.msra.mxu0 0.0
        %704 = vmatprep.subr.mxu0 0.0
        %705 = vmatpush2.xpose.msra.mxu0 0.0
        %706 = vmatprep.mubr.f32.mxu0 0.0
        %707 = vmatmul.mubr.f32.gmra.mxu0 %v634
        %v708 = vpop.f32.mrf.mxu0
        %v709 = vadd.f32 0.0, %v708
        %v710 = vpop.f32.mrf.mxu0
        %711 = vmatprep.mubr.f32.mxu0 0.0
        %712 = vmatmul.mubr.f32.gmra.mxu0 %v637
        %v713 = vpop.f32.mrf.mxu0
        %v714 = vadd.f32 0.0, %v713
        %v715 = vpop.f32.mrf.mxu0
        %716 = vdwg.mxu0
        %717 = vst.msk [vmem:[%s381] sm:$0xff] %vm632, %v709
        %718 = vst.msk [vmem:[%s381 + $0x8] sm:$0xff] %vm632, %v714
        %s719 = smul.u32 2, %s30
        %p720 = scmp.lt.s32.totalorder %s29, 1
        %s721 = scalar_select %p720, %s29, 1
        %p722 = scmp.lt.s32.totalorder %s31, 3
        %s723 = scalar_select %p722, %s31, 3
        %p724 = scmp.lt.s32.totalorder %s719, 1
        %s725 = scalar_select %p724, %s719, 1
        %s726 = smul.addr %s723, 2
        %s727 = sadd.s32 %s725, %s726
        %s728 = smul.addr %s721, 8
        %s729 = sadd.s32 %s727, %s728
        %s730 = smul.addr %s729, 8
        %s731 = scalar_lea.vmem %s6, %s730
        // Predicated region
        $region69: #{tpu_custom_call.1} parent=43 // pred_check
          %p732 = pneg %p203
        $region70: #{tpu_custom_call.1} parent=43 // pred_check_branch
          %734 = sbr.rel (%p732) target = $region72
        $region71: #{tpu_custom_call.1} parent=43 // pred_region
          %s735 = smul.u32 2, %s30
        $region72: #{tpu_custom_call.1} parent=43 // pred_fallthru
          _
      $region44: #{tpu_custom_call.1} parent=5 // pred_fallthru
        _
      %p736 = scmp.le.s32.totalorder 2, %s19
      // Predicated region
      $region73: #{tpu_custom_call.1} parent=5 // pred_check
        %p737 = pneg %p736
      $region74: #{tpu_custom_call.1} parent=5 // pred_check_branch
        %739 = sbr.rel (%p737) target = $region76
      $region75: #{tpu_custom_call.1} parent=5 // pred_region
        %s740 = ssub.s32 %s19, 2
        // Predicated region
        $region77: #{tpu_custom_call.1} parent=75 // pred_check
          %p741 = pneg %p209
        $region78: #{tpu_custom_call.1} parent=75 // pred_check_branch
          %743 = sbr.rel (%p741) target = $region80
        $region79: #{tpu_custom_call.1} parent=75 // pred_region
          %s744 = smul.u32 2, %s33
          %p745 = scmp.lt.s32.totalorder %s32, 1
          %s746 = scalar_select %p745, %s32, 1
          %p747 = scmp.lt.s32.totalorder %s34, 3
          %s748 = scalar_select %p747, %s34, 3
          %p749 = scmp.lt.s32.totalorder %s744, 1
          %s750 = scalar_select %p749, %s744, 1
          %s751 = smul.addr %s748, 2
          %s752 = sadd.s32 %s750, %s751
          %s753 = smul.addr %s746, 8
          %s754 = sadd.s32 %s752, %s753
          %s755 = smul.addr %s754, 8
          %s756 = scalar_lea.vmem %s6, %s755
        $region80: #{tpu_custom_call.1} parent=75 // pred_fallthru
          _
      $region76: #{tpu_custom_call.1} parent=5 // pred_fallthru
        _
    $region6: #{tpu_custom_call.1} parent=1 // loop_footer
      %s23 = sadd.s32 1, %s19
    $region7: #{tpu_custom_call.1} parent=1 // loop_footer_branch
      %18 = sbr.rel target = $region3
    $region8: #{tpu_custom_call.1} parent=1 // loop_exit
      _
    %757 = vsyncpa [#allocation5], 1
    %s758 = scalar_lea.sflag [#allocation5], 1
    %759 = vsyncpa %s758, 1
    %760 = vsyncpa [#allocation7], 1
    %s761 = scalar_lea.sflag [#allocation7], 1
    %762 = vsyncpa %s761, 1
    %763 = vsyncpa [#allocation10], 1

</llo_original>
